<compile_context>
chip_gen: v7x
topology: tpu7x:2x2x1
jax: 0.10.0
libtpu: 0.0.40
codegen_flags: <defaults>
</compile_context>

<pallas_src>
import math
import functools

import jax
import jax.numpy as jnp
from jax import lax
from jax.experimental import pallas as pl
from jax.experimental.pallas import tpu as pltpu

LMAX = 3
NUM_LM = (LMAX + 1) ** 2          # 16 spherical-harmonic components (l = 0..3)
L_OF_LM = [0] + [1] * 3 + [2] * 5 + [3] * 7


def _round_up(x, m):
    return ((x + m - 1) // m) * m


def _pad_rows(x, rows, value=0):
    if x.shape[0] == rows:
        return x
    cfg = [(0, rows - x.shape[0])] + [(0, 0)] * (x.ndim - 1)
    return jnp.pad(x, cfg, constant_values=value)


# ---------------------------------------------------------------------------
# Phase 1: node-local work (skip_tp + linear_up), node-tiled, megacore-parallel
# ---------------------------------------------------------------------------
def _node_kernel(node_attrs_ref, node_feats_ref, w_skip_ref, w_up_ref,
                 sc_ref, up_ref, x_ref, *, n_elem, C):
    na = node_attrs_ref[...]                       # [tileN, n_elem] f32
    nf = node_feats_ref[...]                       # [tileN, C]      f32
    # skip_tp (FullyConnectedTensorProduct Cx0e x Ex0e -> Cx0e) as ONE bf16 MXU
    # call with K = n_elem*C; outer-product features built into a VMEM scratch
    # slab via static lane slices (no concatenate copy).
    for e in range(n_elem):
        x_ref[:, e * C:(e + 1) * C] = (na[:, e:e + 1] * nf).astype(x_ref.dtype)
    sc_ref[...] = jnp.dot(x_ref[...], w_skip_ref[...],
                          preferred_element_type=jnp.float32)
    # linear_up (weight already divided by sqrt(C))
    up_ref[...] = jnp.dot(nf.astype(jnp.bfloat16), w_up_ref[...],
                          preferred_element_type=jnp.float32)


# ---------------------------------------------------------------------------
# Phase 2: message passing over receiver-sorted edges.
#   grid = (node_tiles, max_edge_tiles_per_node_tile)
#   Edge-tiled inputs use data-dependent index_maps driven by scalar-prefetched
#   (first_tile, num_tiles), so each node tile only visits its own edge tiles.
# ---------------------------------------------------------------------------
def _message_kernel(first_ref, num_ref,                        # scalar prefetch
                    recv_ref, ea_ref, ef_ref, gath_ref, wlin_ref,   # inputs
                    msg_ref,                                   # output
                    acc_ref, emsg_ref,                         # scratch
                    *, C, tile_n):
    i = pl.program_id(0)
    j = pl.program_id(1)

    @pl.when(j == 0)
    def _():
        acc_ref[...] = jnp.zeros_like(acc_ref)

    # Only do work for edge tiles that actually belong to this node tile.
    @pl.when(j < num_ref[i])
    def _():
        recv = recv_ref[...]                       # [1, tileE] int32 (sorted)
        ea = ea_ref[...]                           # [tileE, 16]   f32
        ef = ef_ref[...]                           # [tileE, 4*C]  f32
        gath = gath_ref[...]                       # [tileE, C]    f32 (up[sender])
        tile_e = ea.shape[0]

        # Invariant tensor product, written lane-dense into a bf16 VMEM slab.
        lm = 0
        for l in range(LMAX + 1):
            t_l = ef[:, l * C:(l + 1) * C] * gath            # factored once per l
            for _ in range(2 * l + 1):
                emsg_ref[:, lm * C:(lm + 1) * C] = (
                    ea[:, lm:lm + 1] * t_l).astype(emsg_ref.dtype)
                lm += 1

        # MXU scatter-add restricted to this node tile: one-hot(receiver) @ emsg
        # (bf16 operands, f32 accumulation in VMEM scratch).
        node_ids = i * tile_n + lax.broadcasted_iota(jnp.int32, (tile_n, tile_e), 0)
        r_onehot = (recv == node_ids).astype(jnp.float32).astype(jnp.bfloat16)
        acc_ref[...] += jnp.dot(r_onehot, emsg_ref[...],
                                preferred_element_type=jnp.float32)

    # Final per-l e3nn Linear (1/avg_num_neighbors folded into the weight):
    # 16 small matmuls instead of a [16C, 16C] block-diagonal weight.
    @pl.when(j == pl.num_programs(1) - 1)
    def _():
        acc_bf = acc_ref[...].astype(jnp.bfloat16)
        w_l = [wlin_ref[l * C:(l + 1) * C, :] for l in range(LMAX + 1)]
        for lm in range(NUM_LM):
            msg_ref[:, lm * C:(lm + 1) * C] = jnp.dot(
                acc_bf[:, lm * C:(lm + 1) * C], w_l[L_OF_LM[lm]],
                preferred_element_type=jnp.float32)


# ---------------------------------------------------------------------------
# Wrapper
# ---------------------------------------------------------------------------
def invariant_residual_interaction(node_attrs, node_feats, edge_attrs, edge_feats,
                                   edge_index, params, avg_num_neighbors):
    N, C = node_feats.shape
    n_elem = node_attrs.shape[1]
    E = edge_attrs.shape[0]
    f32, bf16 = jnp.float32, jnp.bfloat16

    sender = edge_index[1].astype(jnp.int32)       # PyTorch: sender = edge_index[1]
    receiver = edge_index[0].astype(jnp.int32)     # receiver = edge_index[0]

    # ---- tiling -------------------------------------------------------------
    tile_n1 = min(512, _round_up(N, 8))            # phase 1: big memory-bound tile
    n_pad1 = _round_up(N, tile_n1)
    tile_n = min(256, _round_up(N, 8))             # phase 2: fills 256-wide MXU rows
    n_pad = _round_up(N, tile_n)
    tile_e = min(512, _round_up(E, 128))
    e_pad = _round_up(E, tile_e)
    n_node_tiles = n_pad // tile_n
    n_edge_tiles = e_pad // tile_e

    # ---- weights (normalizations baked in, MXU operands in bf16) ------------
    w_skip_2d = params["w_skip"].reshape(n_elem * C, C).astype(bf16)
    w_up = params["w_up"].astype(bf16)
    w_lin = (params["w_lin"] / avg_num_neighbors).reshape((LMAX + 1) * C, C).astype(bf16)

    # ---- phase 1: sc + linear_up --------------------------------------------
    node_attrs_p = _pad_rows(node_attrs.astype(f32), n_pad1)
    node_feats_p = _pad_rows(node_feats.astype(f32), n_pad1)
    sc_pad, up_pad = pl.pallas_call(
        functools.partial(_node_kernel, n_elem=n_elem, C=C),
        out_shape=(jax.ShapeDtypeStruct((n_pad1, C), f32),
                   jax.ShapeDtypeStruct((n_pad1, C), f32)),
        grid=(n_pad1 // tile_n1,),
        in_specs=[
            pl.BlockSpec((tile_n1, n_elem), lambda i: (i, 0)),
            pl.BlockSpec((tile_n1, C), lambda i: (i, 0)),
            pl.BlockSpec((n_elem * C, C), lambda i: (0, 0)),
            pl.BlockSpec((C, C), lambda i: (0, 0)),
        ],
        out_specs=(pl.BlockSpec((tile_n1, C), lambda i: (i, 0)),
                   pl.BlockSpec((tile_n1, C), lambda i: (i, 0))),
        scratch_shapes=[pltpu.VMEM((tile_n1, n_elem * C), bf16)],
        compiler_params=pltpu.CompilerParams(dimension_semantics=("parallel",)),
    )(node_attrs_p, node_feats_p, w_skip_2d, w_up)

    # ---- sort edges by receiver; gather sender feats once (XLA gather) ------
    order = jnp.argsort(receiver)
    receiver_s = receiver[order]
    sender_s = sender[order]
    edge_attrs_s = edge_attrs.astype(f32)[order]
    edge_feats_s = edge_feats.astype(f32)[order]
    gathered = jnp.take(up_pad, sender_s, axis=0)                 # [E, C] f32

    edge_attrs_p = _pad_rows(edge_attrs_s, e_pad)                 # zero padded
    edge_feats_p = _pad_rows(edge_feats_s, e_pad)
    gathered_p = _pad_rows(gathered, e_pad)
    # Padded receivers get the out-of-range sentinel n_pad so they never match
    # any node id in the one-hot scatter.
    receiver_row = _pad_rows(receiver_s, e_pad, value=n_pad).reshape(1, e_pad)

    # Edge-tile range owned by each node tile (receiver-sorted => contiguous).
    bounds = jnp.searchsorted(
        receiver_s, jnp.arange(n_node_tiles + 1, dtype=jnp.int32) * tile_n)
    lo, hi = bounds[:-1], bounds[1:]
    first_tile = jnp.where(hi > lo, lo // tile_e, 0).astype(jnp.int32)
    num_tiles = jnp.where(hi > lo, (hi - 1) // tile_e - lo // tile_e + 1,
                          0).astype(jnp.int32)
    try:
        max_tiles = max(1, int(jnp.max(num_tiles)))
    except (jax.errors.ConcretizationTypeError,
            jax.errors.TracerIntegerConversionError):
        # TODO(synk): under jit the grid extent must be static; fall back to the
        # worst case (every edge tile possibly visited by one node tile).
        max_tiles = n_edge_tiles

    def _edge_tile(i, j, first_ref, num_ref):
        # Clamp so steps past this node tile's range stay in bounds (their
        # compute is skipped in-kernel via pl.when).
        return jnp.minimum(first_ref[i] + j, n_edge_tiles - 1)

    # ---- phase 2: tensor product -> scatter -> per-l Linear ------------------
    message_flat = pl.pallas_call(
        functools.partial(_message_kernel, C=C, tile_n=tile_n),
        out_shape=jax.ShapeDtypeStruct((n_pad, NUM_LM * C), f32),
        grid_spec=pltpu.PrefetchScalarGridSpec(
            num_scalar_prefetch=2,
            grid=(n_node_tiles, max_tiles),
            in_specs=[
                pl.BlockSpec((1, tile_e),
                             lambda i, j, f, n: (0, _edge_tile(i, j, f, n))),
                pl.BlockSpec((tile_e, NUM_LM),
                             lambda i, j, f, n: (_edge_tile(i, j, f, n), 0)),
                pl.BlockSpec((tile_e, (LMAX + 1) * C),
                             lambda i, j, f, n: (_edge_tile(i, j, f, n), 0)),
                pl.BlockSpec((tile_e, C),
                             lambda i, j, f, n: (_edge_tile(i, j, f, n), 0)),
                pl.BlockSpec(((LMAX + 1) * C, C), lambda i, j, f, n: (0, 0)),
            ],
            out_specs=pl.BlockSpec((tile_n, NUM_LM * C),
                                   lambda i, j, f, n: (i, 0)),
            scratch_shapes=[pltpu.VMEM((tile_n, NUM_LM * C), f32),
                            pltpu.VMEM((tile_e, NUM_LM * C), bf16)],
        ),
        compiler_params=pltpu.CompilerParams(
            dimension_semantics=("parallel", "arbitrary")),
    )(first_tile, num_tiles,
      receiver_row, edge_attrs_p, edge_feats_p, gathered_p, w_lin)

    message = message_flat[:N].reshape(N, NUM_LM, C)
    sc = sc_pad[:N]
    return message, sc


def init_params(key, n_elem, C):
    k1, k2, k3 = jax.random.split(key, 3)
    # skip_tp FullyConnectedTensorProduct: e3nn path norm 1/sqrt(C * n_elem) baked in.
    w_skip = jax.random.normal(k1, (n_elem, C, C), jnp.float32) / math.sqrt(C * n_elem)
    # linear_matmul: weight.reshape(C_in, C_out) / sqrt(C_in).
    w_up = jax.random.normal(k2, (C, C), jnp.float32) / math.sqrt(C)
    # e3nn Linear over Cx(0e+1o+2e+3o): per-l [C, C] weight with 1/sqrt(C) baked in.
    w_lin = jax.random.normal(k3, (LMAX + 1, C, C), jnp.float32) / math.sqrt(C)
    return dict(w_skip=w_skip, w_up=w_up, w_lin=w_lin)


def reference(node_attrs, node_feats, edge_attrs, edge_feats, edge_index, params, avg):
    # pure-JAX reference of the PyTorch forward
    sender = edge_index[1]
    receiver = edge_index[0]
    N, C = node_feats.shape
    E = edge_attrs.shape[0]
    sc = jnp.einsum("ne,ni,eik->nk", node_attrs, node_feats, params["w_skip"])
    up = node_feats @ params["w_up"]
    ef = edge_feats.reshape(E, LMAX + 1, C)
    lmap = jnp.array(L_OF_LM)
    edge_msg = edge_attrs[:, :, None] * ef[:, lmap, :] * up[sender][:, None, :]
    msum = jnp.zeros((N, NUM_LM, C), jnp.float32).at[receiver].add(edge_msg)
    message = jnp.einsum("nmc,mck->nmk", msum, params["w_lin"][lmap]) / avg
    return message, sc


if __name__ == "__main__":
    N, n_elem, C, E = 8, 4, 32, 16
    avg_num_neighbors = 10.0

    key = jax.random.PRNGKey(0)
    ks = jax.random.split(key, 6)
    node_attrs = jax.nn.one_hot(
        jax.random.randint(ks[0], (N,), 0, n_elem), n_elem, dtype=jnp.float32)
    node_feats = jax.random.normal(ks[1], (N, C), jnp.float32)
    edge_attrs = jax.random.normal(ks[2], (E, NUM_LM), jnp.float32)
    edge_feats = jax.random.normal(ks[3], (E, (LMAX + 1) * C), jnp.float32)
    receiver = jax.random.randint(ks[4], (E,), 0, N)
    sender = jax.random.randint(ks[5], (E,), 0, N)
    edge_index = jnp.stack([receiver, sender]).astype(jnp.int32)

    params = init_params(jax.random.PRNGKey(42), n_elem, C)

    message, sc = invariant_residual_interaction(
        node_attrs, node_feats, edge_attrs, edge_feats, edge_index, params,
        avg_num_neighbors)
    jax.block_until_ready((message, sc))

    msg_ref, sc_ref = reference(node_attrs, node_feats, edge_attrs, edge_feats,
                                edge_index, params, avg_num_neighbors)
    # MXU operands are bf16 (f32 accumulation) -> ~1e-2 relative tolerance.
    assert bool(jnp.allclose(message, msg_ref, atol=5e-2, rtol=5e-2)), "message mismatch"
    assert bool(jnp.allclose(sc, sc_ref, atol=5e-2, rtol=5e-2)), "sc mismatch"
    print("KERNEL_OK")
</pallas_src>

<mosaic_0001>
module attributes {stable_mosaic.version = 11 : i64} {
  func.func @_node_kernel(%arg0: i32, %arg1: memref<8x4xf32, #tpu.memory_space<vmem>>, %arg2: memref<8x32xf32, #tpu.memory_space<vmem>>, %arg3: memref<128x32xbf16, #tpu.memory_space<vmem>>, %arg4: memref<32x32xbf16, #tpu.memory_space<vmem>>, %arg5: memref<8x32xf32, #tpu.memory_space<vmem>>, %arg6: memref<8x32xf32, #tpu.memory_space<vmem>>, %arg7: memref<8x128xbf16, #tpu.memory_space<vmem>>) attributes {dimension_semantics = [#tpu.dimension_semantics<parallel>], iteration_bounds = array<i64: 1>, scalar_prefetch = 0 : i64, scratch_operands = 1 : i64, tpu.core_type = #tpu.core_type<tc>, window_params = [{transform_indices = @transform_0, window_bounds = array<i64: 8, 4>}, {transform_indices = @transform_1, window_bounds = array<i64: 8, 32>}, {pipeline_mode = #tpu.pipeline_mode<synchronous>, transform_indices = @transform_2, window_bounds = array<i64: 128, 32>}, {pipeline_mode = #tpu.pipeline_mode<synchronous>, transform_indices = @transform_3, window_bounds = array<i64: 32, 32>}, {transform_indices = @transform_4, window_bounds = array<i64: 8, 32>}, {transform_indices = @transform_5, window_bounds = array<i64: 8, 32>}]} {
    %c0 = arith.constant 0 : index
    %c0_0 = arith.constant 0 : index
    %0 = vector.load %arg1[%c0, %c0_0] : memref<8x4xf32, #tpu.memory_space<vmem>>, vector<8x4xf32>
    %c0_1 = arith.constant 0 : index
    %c0_2 = arith.constant 0 : index
    %1 = vector.load %arg2[%c0_1, %c0_2] : memref<8x32xf32, #tpu.memory_space<vmem>>, vector<8x32xf32>
    %2 = vector.extract_strided_slice %0 {offsets = [0, 0], sizes = [8, 1], strides = [1, 1]} : vector<8x4xf32> to vector<8x1xf32>
    %3 = vector.broadcast %2 : vector<8x1xf32> to vector<8x32xf32>
    %4 = arith.mulf %3, %1 : vector<8x32xf32>
    %5 = arith.truncf %4 : vector<8x32xf32> to vector<8x32xbf16>
    %c0_3 = arith.constant 0 : index
    %c0_4 = arith.constant 0 : index
    %6 = vector.load %arg7[%c0_3, %c0_4] : memref<8x128xbf16, #tpu.memory_space<vmem>>, vector<8x32xbf16>
    tpu.vector_store %arg7[%c0_3, %c0_4], %5 {strides = array<i32>} : memref<8x128xbf16, #tpu.memory_space<vmem>>, vector<8x32xbf16>,
    %7 = vector.extract_strided_slice %0 {offsets = [0, 1], sizes = [8, 1], strides = [1, 1]} : vector<8x4xf32> to vector<8x1xf32>
    %8 = vector.broadcast %7 : vector<8x1xf32> to vector<8x32xf32>
    %9 = arith.mulf %8, %1 : vector<8x32xf32>
    %10 = arith.truncf %9 : vector<8x32xf32> to vector<8x32xbf16>
    %c0_5 = arith.constant 0 : index
    %c32 = arith.constant 32 : index
    %11 = vector.load %arg7[%c0_5, %c32] : memref<8x128xbf16, #tpu.memory_space<vmem>>, vector<8x32xbf16>
    tpu.vector_store %arg7[%c0_5, %c32], %10 {strides = array<i32>} : memref<8x128xbf16, #tpu.memory_space<vmem>>, vector<8x32xbf16>,
    %12 = vector.extract_strided_slice %0 {offsets = [0, 2], sizes = [8, 1], strides = [1, 1]} : vector<8x4xf32> to vector<8x1xf32>
    %13 = vector.broadcast %12 : vector<8x1xf32> to vector<8x32xf32>
    %14 = arith.mulf %13, %1 : vector<8x32xf32>
    %15 = arith.truncf %14 : vector<8x32xf32> to vector<8x32xbf16>
    %c0_6 = arith.constant 0 : index
    %c64 = arith.constant 64 : index
    %16 = vector.load %arg7[%c0_6, %c64] : memref<8x128xbf16, #tpu.memory_space<vmem>>, vector<8x32xbf16>
    tpu.vector_store %arg7[%c0_6, %c64], %15 {strides = array<i32>} : memref<8x128xbf16, #tpu.memory_space<vmem>>, vector<8x32xbf16>,
    %17 = vector.extract_strided_slice %0 {offsets = [0, 3], sizes = [8, 1], strides = [1, 1]} : vector<8x4xf32> to vector<8x1xf32>
    %18 = vector.broadcast %17 : vector<8x1xf32> to vector<8x32xf32>
    %19 = arith.mulf %18, %1 : vector<8x32xf32>
    %20 = arith.truncf %19 : vector<8x32xf32> to vector<8x32xbf16>
    %c0_7 = arith.constant 0 : index
    %c96 = arith.constant 96 : index
    %21 = vector.load %arg7[%c0_7, %c96] : memref<8x128xbf16, #tpu.memory_space<vmem>>, vector<8x32xbf16>
    tpu.vector_store %arg7[%c0_7, %c96], %20 {strides = array<i32>} : memref<8x128xbf16, #tpu.memory_space<vmem>>, vector<8x32xbf16>,
    %c0_8 = arith.constant 0 : index
    %c0_9 = arith.constant 0 : index
    %22 = vector.load %arg7[%c0_8, %c0_9] : memref<8x128xbf16, #tpu.memory_space<vmem>>, vector<8x128xbf16>
    %c0_10 = arith.constant 0 : index
    %c0_11 = arith.constant 0 : index
    %23 = vector.load %arg3[%c0_10, %c0_11] : memref<128x32xbf16, #tpu.memory_space<vmem>>, vector<128x32xbf16>
    %cst = arith.constant dense<0.000000e+00> : vector<8x32xf32>
    %24 = tpu.matmul %22, %23, %cst {dimension_numbers = #tpu.dot_dimension_numbers<[1], [0], [0], [1], [0, 0, 1, 1], [], []>} : vector<8x128xbf16>, vector<128x32xbf16>, vector<8x32xf32> -> vector<8x32xf32>
    %c0_12 = arith.constant 0 : index
    %c0_13 = arith.constant 0 : index
    %25 = vector.load %arg5[%c0_12, %c0_13] : memref<8x32xf32, #tpu.memory_space<vmem>>, vector<8x32xf32>
    tpu.vector_store %arg5[%c0_12, %c0_13], %24 {strides = array<i32>} : memref<8x32xf32, #tpu.memory_space<vmem>>, vector<8x32xf32>,
    %26 = arith.truncf %1 : vector<8x32xf32> to vector<8x32xbf16>
    %c0_14 = arith.constant 0 : index
    %c0_15 = arith.constant 0 : index
    %27 = vector.load %arg4[%c0_14, %c0_15] : memref<32x32xbf16, #tpu.memory_space<vmem>>, vector<32x32xbf16>
    %cst_16 = arith.constant dense<0.000000e+00> : vector<8x32xf32>
    %28 = tpu.matmul %26, %27, %cst_16 {dimension_numbers = #tpu.dot_dimension_numbers<[1], [0], [0], [1], [0, 0, 1, 1], [], []>} : vector<8x32xbf16>, vector<32x32xbf16>, vector<8x32xf32> -> vector<8x32xf32>
    %c0_17 = arith.constant 0 : index
    %c0_18 = arith.constant 0 : index
    %29 = vector.load %arg6[%c0_17, %c0_18] : memref<8x32xf32, #tpu.memory_space<vmem>>, vector<8x32xf32>
    tpu.vector_store %arg6[%c0_17, %c0_18], %28 {strides = array<i32>} : memref<8x32xf32, #tpu.memory_space<vmem>>, vector<8x32xf32>,
    return
  }
  func.func @transform_0(%arg0: i32) -> (i32, i32) {
    %c0_i32 = arith.constant 0 : i32
    %c0_i32_0 = arith.constant 0 : i32
    return %arg0, %c0_i32 : i32, i32
  }
  func.func @transform_1(%arg0: i32) -> (i32, i32) {
    %c0_i32 = arith.constant 0 : i32
    %c0_i32_0 = arith.constant 0 : i32
    return %arg0, %c0_i32 : i32, i32
  }
  func.func @transform_2(%arg0: i32) -> (i32, i32) {
    %c0_i32 = arith.constant 0 : i32
    %c0_i32_0 = arith.constant 0 : i32
    %c0_i32_1 = arith.constant 0 : i32
    return %c0_i32, %c0_i32_0 : i32, i32
  }
  func.func @transform_3(%arg0: i32) -> (i32, i32) {
    %c0_i32 = arith.constant 0 : i32
    %c0_i32_0 = arith.constant 0 : i32
    %c0_i32_1 = arith.constant 0 : i32
    return %c0_i32, %c0_i32_0 : i32, i32
  }
  func.func @transform_4(%arg0: i32) -> (i32, i32) {
    %c0_i32 = arith.constant 0 : i32
    %c0_i32_0 = arith.constant 0 : i32
    return %arg0, %c0_i32 : i32, i32
  }
  func.func @transform_5(%arg0: i32) -> (i32, i32) {
    %c0_i32 = arith.constant 0 : i32
    %c0_i32_0 = arith.constant 0 : i32
    return %arg0, %c0_i32 : i32, i32
  }
}

</mosaic_0001>

<llo_original>
// kernel: tpu_custom_call.1
$region0: #{tpu_custom_call.1}
  #allocation0 [shape = 'u32[]', space=smem, size = 0x4, offset = 0x4, fixed_abs, tag = 'smem constant byte address 0x4 - core index']
  #allocation1 [shape = 'u32[144,128]{1,0:T(1,128)}', space=vmem, size = 0x12000, scoped, tag = 'internal scratch']
  #allocation2 [shape = 'bf16[8,128]{1,0:T(8,128)(2,1)}', space=vmem, size = 0x800, scoped, tag = 'scratch operand']
  %s0 = inlined_call_operand.vmem [shape: f32[8,4], index: 0, kind: input, shape index: {}]
  %s1 = inlined_call_operand.vmem [shape: f32[8,32], index: 1, kind: input, shape index: {}]
  %s2 = inlined_call_operand.vmem [shape: bf16[128,32], index: 2, kind: input, shape index: {}]
  %s3 = inlined_call_operand.vmem [shape: bf16[32,32], index: 3, kind: input, shape index: {}]
  %s4 = inlined_call_operand.hbm [shape: f32[8,32], index: 4, kind: output, shape index: {0}]
  %s5 = inlined_call_operand.hbm [shape: f32[8,32], index: 5, kind: output, shape index: {1}]
  %6 = xla_tuple %s4, %s5
  %s7 = sld [smem:[#allocation0]]
  $region34: #{tpu_custom_call.1} parent=0
    _
  %s9 = ssub.s32 1, %s7
  %s10 = scalar_select 0, %s9, %s7
  $region1: #{tpu_custom_call.1} parent=0
    #allocation3 [shape = 'u8[4096]{0}', space=vmem, size = 0x1000, scoped, tag = 'output window, operand 0, single buffered']
    #allocation4 [shape = 's32[1]{0}', space=sflag, size = 0x4, scoped, tag = 'scoped memory for tpu_custom_call.1']
    #allocation5 [shape = 'u8[4096]{0}', space=vmem, size = 0x1000, scoped, tag = 'output window, operand 1, single buffered']
    #allocation6 [shape = 's32[1]{0}', space=sflag, size = 0x4, scoped, tag = 'scoped memory for tpu_custom_call.1']
    %11 = vsyncpa [#allocation4], 0
    %12 = vsyncpa [#allocation6], 0
    // Predicated region
    $region2: #{tpu_custom_call.1} parent=1 // pred_check
      _
    $region3: #{tpu_custom_call.1} parent=1 // pred_check_branch
      %14 = sbr.rel (0) target = $region5
    $region4: #{tpu_custom_call.1} parent=1 // pred_region
      _
    $region5: #{tpu_custom_call.1} parent=1 // pred_fallthru
      _
    // Predicated region
    $region6: #{tpu_custom_call.1} parent=1 // pred_check
      _
    $region7: #{tpu_custom_call.1} parent=1 // pred_check_branch
      %16 = sbr.rel (0) target = $region9
    $region8: #{tpu_custom_call.1} parent=1 // pred_region
      _
    $region9: #{tpu_custom_call.1} parent=1 // pred_fallthru
      _
    // Predicated region
    $region10: #{tpu_custom_call.1} parent=1 // pred_check
      _
    $region11: #{tpu_custom_call.1} parent=1 // pred_check_branch
      %18 = sbr.rel (0) target = $region13
    $region12: #{tpu_custom_call.1} parent=1 // pred_region
      _
    $region13: #{tpu_custom_call.1} parent=1 // pred_fallthru
      _
    // Predicated region
    $region14: #{tpu_custom_call.1} parent=1 // pred_check
      _
    $region15: #{tpu_custom_call.1} parent=1 // pred_check_branch
      %20 = sbr.rel (0) target = $region17
    $region16: #{tpu_custom_call.1} parent=1 // pred_region
      _
    $region17: #{tpu_custom_call.1} parent=1 // pred_fallthru
      _
    %v22 = vld [vmem:[%s0] sm:$0xff]
    %v23 = vld [vmem:[%s1] sm:$0xff]
    %25 = vset.pattern.permute.xlu0 0
    %26 = vperm.xlu0 %25, %v22
    %v27 = vpop.permute.xlu0 %26
    %v29 = vmul.f32 %v27, %v23
    %v30 = vpack.c.bf16 %v29, %v29
    %vm31 = vcmask 257024
    %32 = vst.msk [vmem:[#allocation2] sm:$0xf] %vm31, %v30
    %33 = vset.pattern.permute.xlu0 1
    %34 = vperm.xlu0 %33, %v22
    %v35 = vpop.permute.xlu0 %34
    %v37 = vmul.f32 %v35, %v23
    %v38 = vpack.c.bf16 %v37, %v37
    %v40 = vunpack.c.l.b16 %v38
    %v41 = vpack.c.b16 %v40, %v40
    %42 = vrot.lane.b32.xlu0 %v41, 32
    %v43 = vpop.permute.xlu0 %42
    %vm45 = vcmask 519424
    %46 = vst.msk [vmem:[#allocation2] sm:$0xf] %vm45, %v43
    %47 = vset.pattern.permute.xlu0 2
    %48 = vperm.xlu0 %47, %v22
    %v49 = vpop.permute.xlu0 %48
    %v51 = vmul.f32 %v49, %v23
    %v52 = vpack.c.bf16 %v51, %v51
    %v54 = vunpack.c.l.b16 %v52
    %v55 = vpack.c.b16 %v54, %v54
    %56 = vrot.lane.b32.xlu0 %v55, 64
    %v57 = vpop.permute.xlu0 %56
    %vm59 = vcmask 781824
    %60 = vst.msk [vmem:[#allocation2] sm:$0xf] %vm59, %v57
    %61 = vset.pattern.permute.xlu0 3
    %62 = vperm.xlu0 %61, %v22
    %v63 = vpop.permute.xlu0 %62
    %v65 = vmul.f32 %v63, %v23
    %v66 = vpack.c.bf16 %v65, %v65
    %v68 = vunpack.c.l.b16 %v66
    %v69 = vpack.c.b16 %v68, %v68
    %70 = vrot.lane.b32.xlu0 %v69, 96
    %v71 = vpop.permute.xlu0 %70
    %vm73 = vcmask 1044224
    %74 = vst.msk [vmem:[#allocation2] sm:$0xf] %vm73, %v71
    %v75 = vld [vmem:[#allocation2] sm:$0xf]
    %v76 = vld [vmem:[%s2] sm:$0xf]
    %v77 = vld [vmem:[%s2 + $0x4] sm:$0xf]
    %v78 = vld [vmem:[%s2 + $0x8] sm:$0xf]
    %v79 = vld [vmem:[%s2 + $0xc] sm:$0xf]
    %v80 = vld [vmem:[%s2 + $0x10] sm:$0xf]
    %v81 = vld [vmem:[%s2 + $0x14] sm:$0xf]
    %v82 = vld [vmem:[%s2 + $0x18] sm:$0xf]
    %v83 = vld [vmem:[%s2 + $0x1c] sm:$0xf]
    %v84 = vld [vmem:[%s2 + $0x20] sm:$0xf]
    %v85 = vld [vmem:[%s2 + $0x24] sm:$0xf]
    %v86 = vld [vmem:[%s2 + $0x28] sm:$0xf]
    %v87 = vld [vmem:[%s2 + $0x2c] sm:$0xf]
    %v88 = vld [vmem:[%s2 + $0x30] sm:$0xf]
    %v89 = vld [vmem:[%s2 + $0x34] sm:$0xf]
    %v90 = vld [vmem:[%s2 + $0x38] sm:$0xf]
    %v91 = vld [vmem:[%s2 + $0x3c] sm:$0xf]
    %v108 = vunpack.c.l.b16 %v76
    %v109 = vunpack.c.l.b16 %v77
    %v110 = vunpack.c.l.b16 %v78
    %v111 = vunpack.c.l.b16 %v79
    %v112 = vunpack.c.l.b16 %v80
    %v113 = vunpack.c.l.b16 %v81
    %v114 = vunpack.c.l.b16 %v82
    %v115 = vunpack.c.l.b16 %v83
    %v116 = vunpack.c.l.b16 %v84
    %v117 = vunpack.c.l.b16 %v85
    %v118 = vunpack.c.l.b16 %v86
    %v119 = vunpack.c.l.b16 %v87
    %v120 = vunpack.c.l.b16 %v88
    %v121 = vunpack.c.l.b16 %v89
    %v122 = vunpack.c.l.b16 %v90
    %v123 = vunpack.c.l.b16 %v91
    %v124 = vpack.c.b16 %v109, %v108
    %v125 = vpack.c.b16 %v111, %v110
    %v126 = vpack.c.b16 %v113, %v112
    %v127 = vpack.c.b16 %v115, %v114
    %v128 = vpack.c.b16 %v117, %v116
    %v129 = vpack.c.b16 %v119, %v118
    %v130 = vpack.c.b16 %v121, %v120
    %v131 = vpack.c.b16 %v123, %v122
    %140 = vmatprep.subr.bf16.mxu0 0
    %141 = vmatpush1.bf16.msra.mxu0 %v124
    %142 = vmatprep.subr.bf16.mxu0 0
    %143 = vmatpush1.bf16.msra.mxu0 %v125
    %144 = vmatprep.subr.bf16.mxu0 0
    %145 = vmatpush1.bf16.msra.mxu0 %v126
    %146 = vmatprep.subr.bf16.mxu0 0
    %147 = vmatpush1.bf16.msra.mxu0 %v127
    %148 = vmatprep.subr.bf16.mxu0 0
    %149 = vmatpush1.bf16.msra.mxu0 %v128
    %150 = vmatprep.subr.bf16.mxu0 0
    %151 = vmatpush1.bf16.msra.mxu0 %v129
    %152 = vmatprep.subr.bf16.mxu0 0
    %153 = vmatpush1.bf16.msra.mxu0 %v130
    %154 = vmatprep.subr.bf16.mxu0 0
    %155 = vmatpush1.bf16.msra.mxu0 %v131
    %156 = vmatprep.subr.bf16.mxu0 0
    %157 = vmatpush1.bf16.msra.mxu0 0
    %158 = vmatprep.subr.bf16.mxu0 0
    %159 = vmatpush1.bf16.msra.mxu0 0
    %160 = vmatprep.subr.bf16.mxu0 0
    %161 = vmatpush1.bf16.msra.mxu0 0
    %162 = vmatprep.subr.bf16.mxu0 0
    %163 = vmatpush1.bf16.msra.mxu0 0
    %164 = vmatprep.subr.bf16.mxu0 0
    %165 = vmatpush1.bf16.msra.mxu0 0
    %166 = vmatprep.subr.bf16.mxu0 0
    %167 = vmatpush1.bf16.msra.mxu0 0
    %168 = vmatprep.subr.bf16.mxu0 0
    %169 = vmatpush1.bf16.msra.mxu0 0
    %170 = vmatprep.subr.bf16.mxu0 0
    %171 = vmatpush1.bf16.msra.mxu0 0
    %172 = vmatprep.mubr.bf16.mxu0 0
    %173 = vmatmul.mubr.bf16.gmra.mrb[0].mxu0 %v75
    %v174 = vpop.f32.mrb[0].mxu0
    %v175 = vadd.f32 0.0, %v174
    %v176 = vpop.f32.mrb[0].mxu0
    %v177 = vpop.f32.mrb[0].mxu0
    %v178 = vpop.f32.mrb[0].mxu0
    %179 = vdwg.mxu0
    %vm180 = vcmask 261120
    %181 = vst.msk [vmem:[#allocation3] sm:$0xff] %vm180, %v175
    %v182 = vpack.c.bf16 %v23, %v23
    %v183 = vld [vmem:[%s3] sm:$0xf]
    %v184 = vld [vmem:[%s3 + $0x4] sm:$0xf]
    %v185 = vld [vmem:[%s3 + $0x8] sm:$0xf]
    %v186 = vld [vmem:[%s3 + $0xc] sm:$0xf]
    %v191 = vunpack.c.l.b16 %v183
    %v192 = vunpack.c.l.b16 %v184
    %v193 = vunpack.c.l.b16 %v185
    %v194 = vunpack.c.l.b16 %v186
    %v195 = vpack.c.b16 %v192, %v191
    %v196 = vpack.c.b16 %v194, %v193
    %v200 = vsel %vm180, %v182, 0
    %202 = vmatprep.subr.bf16.mxu0 0
    %203 = vmatpush1.bf16.msra.mxu0 %v195
    %204 = vmatprep.subr.bf16.mxu0 0
    %205 = vmatpush1.bf16.msra.mxu0 %v196
    %206 = vmatprep.subr.bf16.mxu0 0
    %207 = vmatpush1.bf16.msra.mxu0 0
    %208 = vmatprep.subr.bf16.mxu0 0
    %209 = vmatpush1.bf16.msra.mxu0 0
    %210 = vmatprep.subr.bf16.mxu0 0
    %211 = vmatpush1.bf16.msra.mxu0 0
    %212 = vmatprep.subr.bf16.mxu0 0
    %213 = vmatpush1.bf16.msra.mxu0 0
    %214 = vmatprep.subr.bf16.mxu0 0
    %215 = vmatpush1.bf16.msra.mxu0 0
    %216 = vmatprep.subr.bf16.mxu0 0
    %217 = vmatpush1.bf16.msra.mxu0 0
    %218 = vmatprep.subr.bf16.mxu0 0
    %219 = vmatpush1.bf16.msra.mxu0 0
    %220 = vmatprep.subr.bf16.mxu0 0
    %221 = vmatpush1.bf16.msra.mxu0 0
    %222 = vmatprep.subr.bf16.mxu0 0
    %223 = vmatpush1.bf16.msra.mxu0 0
    %224 = vmatprep.subr.bf16.mxu0 0
    %225 = vmatpush1.bf16.msra.mxu0 0
    %226 = vmatprep.subr.bf16.mxu0 0
    %227 = vmatpush1.bf16.msra.mxu0 0
    %228 = vmatprep.subr.bf16.mxu0 0
    %229 = vmatpush1.bf16.msra.mxu0 0
    %230 = vmatprep.subr.bf16.mxu0 0
    %231 = vmatpush1.bf16.msra.mxu0 0
    %232 = vmatprep.subr.bf16.mxu0 0
    %233 = vmatpush1.bf16.msra.mxu0 0
    %234 = vmatprep.mubr.bf16.mxu0 0
    %235 = vmatmul.mubr.bf16.gmra.mrb[0].mxu0 %v200
    %v236 = vpop.f32.mrb[0].mxu0
    %v237 = vadd.f32 0.0, %v236
    %v238 = vpop.f32.mrb[0].mxu0
    %v239 = vpop.f32.mrb[0].mxu0
    %v240 = vpop.f32.mrb[0].mxu0
    %241 = vdwg.mxu0
    %242 = vst.msk [vmem:[#allocation5] sm:$0xff] %vm180, %v237
    // Predicated region
    $region18: #{tpu_custom_call.1} parent=1 // pred_check
      _
    $region19: #{tpu_custom_call.1} parent=1 // pred_check_branch
      %244 = sbr.rel (0) target = $region21
    $region20: #{tpu_custom_call.1} parent=1 // pred_region
      %s246 = ssub.s32 128, 128
      %247 = vsyncadd [#allocation4], %s246
      %s249 = sshll.u32 [#allocation3], 4
      %s250 = int_to_ptr.vmem [resolvable:$true] %s249
      %252 = dma.vmem_to_hbm [thread:$0]  %s250, 128, %s4, [#allocation4]
    $region21: #{tpu_custom_call.1} parent=1 // pred_fallthru
      _
    // Predicated region
    $region22: #{tpu_custom_call.1} parent=1 // pred_check
      _
    $region23: #{tpu_custom_call.1} parent=1 // pred_check_branch
      %254 = sbr.rel (0) target = $region25
    $region24: #{tpu_custom_call.1} parent=1 // pred_region
      %s256 = ssub.s32 128, 128
      %257 = vsyncadd [#allocation6], %s256
      %s259 = sshll.u32 [#allocation5], 4
      %s260 = int_to_ptr.vmem [resolvable:$true] %s259
      %262 = dma.vmem_to_hbm [thread:$0]  %s260, 128, %s5, [#allocation6]
    $region25: #{tpu_custom_call.1} parent=1 // pred_fallthru
      _
    // Predicated region
    $region26: #{tpu_custom_call.1} parent=1 // pred_check
      _
    $region27: #{tpu_custom_call.1} parent=1 // pred_check_branch
      %264 = sbr.rel (0) target = $region29
    $region28: #{tpu_custom_call.1} parent=1 // pred_region
      %265 = dma.done [#allocation4], 128
    $region29: #{tpu_custom_call.1} parent=1 // pred_fallthru
      _
    // Predicated region
    $region30: #{tpu_custom_call.1} parent=1 // pred_check
      _
    $region31: #{tpu_custom_call.1} parent=1 // pred_check_branch
      %267 = sbr.rel (0) target = $region33
    $region32: #{tpu_custom_call.1} parent=1 // pred_region
      %268 = dma.done [#allocation6], 128
    $region33: #{tpu_custom_call.1} parent=1 // pred_fallthru
      _
    %269 = vsyncpa [#allocation4], 1
    %270 = vsyncpa [#allocation6], 1

</llo_original>
